<compile_context>
chip_gen: v7x
topology: tpu7x:2x2x1
jax: 0.10.0
libtpu: 0.0.40
codegen_flags: <defaults>
</compile_context>

<pallas_src>
import functools

import jax
import jax.numpy as jnp
from jax.experimental import pallas as pl
from jax.experimental.pallas import tpu as pltpu


@functools.lru_cache(maxsize=1)
def _tpu_info():
    """Host-side query of TPU generation + physical VMEM (with safe fallbacks)."""
    try:
        kind = jax.devices()[0].device_kind.lower()
    except Exception:  # pragma: no cover
        kind = ""
    is_v7 = "v7" in kind
    is_v6 = "v6" in kind
    is_v5 = "v5" in kind
    vmem_bytes = None
    try:
        vmem_bytes = int(pltpu.get_tpu_info().vmem_capacity_bytes)
    except Exception:  # pragma: no cover
        vmem_bytes = None
    if vmem_bytes is None or vmem_bytes <= 0:
        vmem_bytes = (64 << 20) if is_v7 else (128 << 20)
    return {"is_v7": is_v7, "is_v6": is_v6, "is_v5": is_v5, "vmem_bytes": vmem_bytes}


def _ffn_kernel(x_ref, w12_ref, w3_ref, o_ref, acc_ref, *, block_h, gate_dtype):
    """One (row-tile, hidden-tile) step: acc (+)= (silu(x@W1_h) * (x@W2_h)) @ W3_h."""
    h_idx = pl.program_id(1)

    x = x_ref[...]                         # (bm, dim), native dtype (f32/bf16)
    w12 = w12_ref[...]                     # (dim, 2*bh): [W1_tile | W2_tile]
    h12 = jnp.dot(x, w12, preferred_element_type=jnp.float32)
    h1 = h12[:, :block_h].astype(gate_dtype)
    h2 = h12[:, block_h:].astype(gate_dtype)
    # SiLU gate (sigmoid -> EUP, muls -> VPU).
    gated = (h1 * jax.nn.sigmoid(h1)) * h2
    partial = jnp.dot(gated.astype(w3_ref.dtype), w3_ref[...],
                      preferred_element_type=jnp.float32)

    @pl.when(h_idx == 0)
    def _():
        acc_ref[...] = partial             # direct write: no zero-init + RMW

    @pl.when(h_idx > 0)
    def _():
        acc_ref[...] += partial

    @pl.when(h_idx == pl.num_programs(1) - 1)
    def _():
        o_ref[...] = acc_ref[...].astype(o_ref.dtype)


def prepare_ffn_weights(w1, w2, w3, *, block_h=None, weight_dtype=None):
    """One-time (load-time) prep. PyTorch nn.Linear layouts: w1,w2=(hidden,dim), w3=(dim,hidden).

    Returns:
      w12: (nh, dim, 2*bh) -- per-hidden-tile fused [W1^T | W2^T] column slabs
      w3t: (nh, bh, dim)   -- per-hidden-tile W3^T row slabs
    """
    hidden, dim = w1.shape
    assert w2.shape == (hidden, dim) and w3.shape == (dim, hidden)
    info = _tpu_info()
    if block_h is None:
        # v7x has 64 MiB VMEM per TC: keep hidden tiles half-sized there.
        block_h = 512 if info["is_v7"] else 1024

    if weight_dtype is not None:
        w1 = w1.astype(weight_dtype)
        w2 = w2.astype(weight_dtype)
        w3 = w3.astype(weight_dtype)

    # Hidden tile: multiple of 128, no larger than requested or (padded) hidden.
    bh = max(128, min(block_h, pl.cdiv(hidden, 128) * 128))
    bh = (bh // 128) * 128
    # Zero-pad hidden up to a multiple of bh (padded units contribute exactly 0:
    # silu(0)*0 = 0 and the matching W3 columns are zero).
    hidden_pad = pl.cdiv(hidden, bh) * bh
    if hidden_pad != hidden:
        pad = hidden_pad - hidden
        w1 = jnp.pad(w1, ((0, pad), (0, 0)))
        w2 = jnp.pad(w2, ((0, pad), (0, 0)))
        w3 = jnp.pad(w3, ((0, 0), (0, pad)))

    nh = hidden_pad // bh
    w1t = w1.T.reshape(dim, nh, bh)
    w2t = w2.T.reshape(dim, nh, bh)
    w12 = jnp.concatenate([w1t, w2t], axis=-1).transpose(1, 0, 2)   # (nh, dim, 2*bh)
    w3t = w3.T.reshape(nh, bh, dim)                                 # (nh, bh, dim)
    return w12, w3t


def _auto_block_m(m, info):
    """Generation-aware row tile for large m; full (rounded) m for small/decode calls."""
    if info["is_v5"]:
        target = 256            # v5e MXU/HBM crossover ~240 rows
    else:
        target = 512            # v6e wants >=512; v7x crossover ~310 -> 512 is safe
    if m <= target:
        return max(16, pl.cdiv(m, 16) * 16)
    return target


@functools.partial(jax.jit, static_argnames=("block_m",))
def feed_forward(x, w12, w3t, *, block_m=None):
    """x: (..., dim); w12/w3t from prepare_ffn_weights."""
    orig_shape = x.shape
    dim = orig_shape[-1]
    nh, wdim, two_bh = w12.shape
    bh = two_bh // 2
    assert wdim == dim, "weight/activation dim mismatch"

    info = _tpu_info()
    x2d = x.reshape(-1, dim)
    m = x2d.shape[0]

    if block_m is None:
        bm = _auto_block_m(m, info)
    else:
        bm = max(16, pl.cdiv(min(block_m, max(m, 16)), 16) * 16)

    x_bytes = jnp.dtype(x.dtype).itemsize
    w_bytes = jnp.dtype(w12.dtype).itemsize
    vmem_ceiling = int(0.85 * info["vmem_bytes"])   # physical VMEM minus headroom

    def _est(bm_):
        # Double-buffered x / W1|W2 / W3 / out tiles + f32 accumulator.
        return (2 * (bm_ * dim * x_bytes
                     + dim * two_bh * w_bytes
                     + bh * dim * w_bytes
                     + bm_ * dim * x_bytes)
                + bm_ * dim * 4)

    # Shrink the row tile if the steady-state footprint would not fit this chip.
    while _est(bm) > vmem_ceiling and bm > 128:
        bm = max(128, ((bm // 2) // 16) * 16)

    m_pad = pl.cdiv(m, bm) * bm
    if m_pad != m:
        x2d = jnp.pad(x2d, ((0, m_pad - m), (0, 0)))

    vmem_limit = int(min(vmem_ceiling, max(32 << 20, 2 * _est(bm))))

    # Gate math in bf16 only where the VPU/EUP have bf16 paths (v6e/v7x) and weights
    # are already bf16; otherwise stay in f32.
    gate_dtype = (jnp.bfloat16
                  if (w12.dtype == jnp.bfloat16 and not info["is_v5"])
                  else jnp.float32)

    grid = (m_pad // bm, nh)  # M parallel (megacore), hidden reduction innermost.
    kernel = functools.partial(_ffn_kernel, block_h=bh, gate_dtype=gate_dtype)
    out = pl.pallas_call(
        kernel,
        out_shape=jax.ShapeDtypeStruct((m_pad, dim), x.dtype),
        grid_spec=pltpu.PrefetchScalarGridSpec(
            num_scalar_prefetch=0,
            grid=grid,
            in_specs=[
                pl.BlockSpec((bm, dim), lambda i, h: (i, 0)),             # x row-tile
                pl.BlockSpec((None, dim, two_bh), lambda i, h: (h, 0, 0)),  # fused W1|W2 tile
                pl.BlockSpec((None, bh, dim), lambda i, h: (h, 0, 0)),      # W3 tile
            ],
            out_specs=pl.BlockSpec((bm, dim), lambda i, h: (i, 0)),
            scratch_shapes=[pltpu.VMEM((bm, dim), jnp.float32)],
        ),
        compiler_params=pltpu.CompilerParams(
            dimension_semantics=("parallel", "arbitrary"),
            vmem_limit_bytes=vmem_limit,
        ),
    )(x2d, w12, w3t)

    if m_pad != m:
        out = out[:m]
    return out.reshape(orig_shape)


def _reference(x, w1, w2, w3):
    with jax.default_matmul_precision("highest"):
        h1 = x @ w1.T
        h2 = x @ w2.T
        return (jax.nn.silu(h1) * h2) @ w3.T


if __name__ == "__main__":
    key = jax.random.PRNGKey(0)
    batch, seq, dim, hidden = 2, 8, 128, 256

    kx, k1, k2, k3 = jax.random.split(key, 4)
    x = jax.random.normal(kx, (batch, seq, dim), dtype=jnp.float32)
    # Deterministic "nn.Linear"-shaped weights (out_features, in_features).
    w1 = jax.random.normal(k1, (hidden, dim), dtype=jnp.float32) * 0.05
    w2 = jax.random.normal(k2, (hidden, dim), dtype=jnp.float32) * 0.05
    w3 = jax.random.normal(k3, (dim, hidden), dtype=jnp.float32) * 0.05

    # One-time weight fusion/transpose, hoisted out of the per-call path.
    w12, w3t = prepare_ffn_weights(w1, w2, w3)

    out = feed_forward(x, w12, w3t)
    out = jax.block_until_ready(out)

    ref = _reference(x, w1, w2, w3)
    assert out.shape == x.shape
    assert jnp.allclose(out, ref, atol=5e-3, rtol=5e-3), "mismatch vs reference"

    print("KERNEL_OK")
</pallas_src>

<mosaic_0001>
module attributes {stable_mosaic.version = 11 : i64} {
  func.func @_ffn_kernel(%arg0: i32, %arg1: i32, %arg2: memref<16x128xf32, #tpu.memory_space<vmem>>, %arg3: memref<1x128x512xf32, #tpu.memory_space<vmem>>, %arg4: memref<1x256x128xf32, #tpu.memory_space<vmem>>, %arg5: memref<16x128xf32, #tpu.memory_space<vmem>>, %arg6: memref<16x128xf32, #tpu.memory_space<vmem>>) attributes {dimension_semantics = [#tpu.dimension_semantics<parallel>, #tpu.dimension_semantics<arbitrary>], iteration_bounds = array<i64: 1, 1>, scalar_prefetch = 0 : i64, scratch_operands = 1 : i64, tpu.core_type = #tpu.core_type<tc>, window_params = [{transform_indices = @transform_0, window_bounds = array<i64: 16, 128>}, {transform_indices = @transform_1, window_bounds = array<i64: 1, 128, 512>}, {transform_indices = @transform_2, window_bounds = array<i64: 1, 256, 128>}, {transform_indices = @transform_3, window_bounds = array<i64: 16, 128>}]} {
    %c0 = arith.constant 0 : index
    %c0_0 = arith.constant 0 : index
    %0 = vector.load %arg2[%c0, %c0_0] : memref<16x128xf32, #tpu.memory_space<vmem>>, vector<16x128xf32>
    %c0_1 = arith.constant 0 : index
    %c0_2 = arith.constant 0 : index
    %c0_3 = arith.constant 0 : index
    %1 = vector.load %arg3[%c0_1, %c0_2, %c0_3] : memref<1x128x512xf32, #tpu.memory_space<vmem>>, vector<1x128x512xf32>
    %2 = vector.shape_cast %1 : vector<1x128x512xf32> to vector<128x512xf32>
    %cst = arith.constant dense<0.000000e+00> : vector<16x512xf32>
    %3 = tpu.matmul %0, %2, %cst {dimension_numbers = #tpu.dot_dimension_numbers<[1], [0], [0], [1], [0, 0, 1, 1], [], []>} : vector<16x128xf32>, vector<128x512xf32>, vector<16x512xf32> -> vector<16x512xf32>
    %4 = vector.extract_strided_slice %3 {offsets = [0, 0], sizes = [16, 256], strides = [1, 1]} : vector<16x512xf32> to vector<16x256xf32>
    %5 = vector.extract_strided_slice %3 {offsets = [0, 256], sizes = [16, 256], strides = [1, 1]} : vector<16x512xf32> to vector<16x256xf32>
    %6 = arith.negf %4 : vector<16x256xf32>
    %7 = math.exp %6 : vector<16x256xf32>
    %cst_4 = arith.constant 1.000000e+00 : f32
    %8 = vector.broadcast %cst_4 : f32 to vector<16x256xf32>
    %9 = arith.addf %8, %7 : vector<16x256xf32>
    %10 = arith.divf %8, %9 : vector<16x256xf32>
    %11 = arith.mulf %4, %10 : vector<16x256xf32>
    %12 = arith.mulf %11, %5 : vector<16x256xf32>
    %c0_5 = arith.constant 0 : index
    %c0_6 = arith.constant 0 : index
    %c0_7 = arith.constant 0 : index
    %13 = vector.load %arg4[%c0_5, %c0_6, %c0_7] : memref<1x256x128xf32, #tpu.memory_space<vmem>>, vector<1x256x128xf32>
    %14 = vector.shape_cast %13 : vector<1x256x128xf32> to vector<256x128xf32>
    %cst_8 = arith.constant dense<0.000000e+00> : vector<16x128xf32>
    %15 = tpu.matmul %12, %14, %cst_8 {dimension_numbers = #tpu.dot_dimension_numbers<[1], [0], [0], [1], [0, 0, 1, 1], [], []>} : vector<16x256xf32>, vector<256x128xf32>, vector<16x128xf32> -> vector<16x128xf32>
    %c0_i32 = arith.constant 0 : i32
    %16 = arith.cmpi eq, %arg1, %c0_i32 : i32
    %17 = arith.extui %16 : i1 to i32
    %c0_i32_9 = arith.constant 0 : i32
    %18 = arith.cmpi ne, %17, %c0_i32_9 : i32
    scf.if %18 {
      %c0_14 = arith.constant 0 : index
      %c0_15 = arith.constant 0 : index
      %25 = vector.load %arg6[%c0_14, %c0_15] : memref<16x128xf32, #tpu.memory_space<vmem>>, vector<16x128xf32>
      tpu.vector_store %arg6[%c0_14, %c0_15], %15 {strides = array<i32>} : memref<16x128xf32, #tpu.memory_space<vmem>>, vector<16x128xf32>,
    } else {
    }
    %c0_i32_10 = arith.constant 0 : i32
    %19 = arith.cmpi sgt, %arg1, %c0_i32_10 : i32
    %20 = arith.extui %19 : i1 to i32
    %c0_i32_11 = arith.constant 0 : i32
    %21 = arith.cmpi ne, %20, %c0_i32_11 : i32
    scf.if %21 {
      %c0_14 = arith.constant 0 : index
      %c0_15 = arith.constant 0 : index
      %25 = vector.load %arg6[%c0_14, %c0_15] : memref<16x128xf32, #tpu.memory_space<vmem>>, vector<16x128xf32>
      %26 = arith.addf %25, %15 : vector<16x128xf32>
      %c0_16 = arith.constant 0 : index
      %c0_17 = arith.constant 0 : index
      %27 = vector.load %arg6[%c0_16, %c0_17] : memref<16x128xf32, #tpu.memory_space<vmem>>, vector<16x128xf32>
      tpu.vector_store %arg6[%c0_16, %c0_17], %26 {strides = array<i32>} : memref<16x128xf32, #tpu.memory_space<vmem>>, vector<16x128xf32>,
    } else {
    }
    %c0_i32_12 = arith.constant 0 : i32
    %22 = arith.cmpi eq, %arg1, %c0_i32_12 : i32
    %23 = arith.extui %22 : i1 to i32
    %c0_i32_13 = arith.constant 0 : i32
    %24 = arith.cmpi ne, %23, %c0_i32_13 : i32
    scf.if %24 {
      %c0_14 = arith.constant 0 : index
      %c0_15 = arith.constant 0 : index
      %25 = vector.load %arg6[%c0_14, %c0_15] : memref<16x128xf32, #tpu.memory_space<vmem>>, vector<16x128xf32>
      %c0_16 = arith.constant 0 : index
      %c0_17 = arith.constant 0 : index
      %26 = vector.load %arg5[%c0_16, %c0_17] : memref<16x128xf32, #tpu.memory_space<vmem>>, vector<16x128xf32>
      tpu.vector_store %arg5[%c0_16, %c0_17], %25 {strides = array<i32>} : memref<16x128xf32, #tpu.memory_space<vmem>>, vector<16x128xf32>,
    } else {
    }
    return
  }
  func.func @transform_0(%arg0: i32, %arg1: i32) -> (i32, i32) {
    %c0_i32 = arith.constant 0 : i32
    %c0_i32_0 = arith.constant 0 : i32
    return %arg0, %c0_i32 : i32, i32
  }
  func.func @transform_1(%arg0: i32, %arg1: i32) -> (i32, i32, i32) {
    %c0_i32 = arith.constant 0 : i32
    %c0_i32_0 = arith.constant 0 : i32
    %c0_i32_1 = arith.constant 0 : i32
    return %arg1, %c0_i32, %c0_i32_0 : i32, i32, i32
  }
  func.func @transform_2(%arg0: i32, %arg1: i32) -> (i32, i32, i32) {
    %c0_i32 = arith.constant 0 : i32
    %c0_i32_0 = arith.constant 0 : i32
    %c0_i32_1 = arith.constant 0 : i32
    return %arg1, %c0_i32, %c0_i32_0 : i32, i32, i32
  }
  func.func @transform_3(%arg0: i32, %arg1: i32) -> (i32, i32) {
    %c0_i32 = arith.constant 0 : i32
    %c0_i32_0 = arith.constant 0 : i32
    return %arg0, %c0_i32 : i32, i32
  }
}

</mosaic_0001>

<llo_original>
// kernel: feed_forward.1
$region0: #{feed_forward.1}
  #allocation0 [shape = 'u32[]', space=smem, size = 0x4, offset = 0x4, fixed_abs, tag = 'smem constant byte address 0x4 - core index']
  #allocation1 [shape = 'u32[144,128]{1,0:T(1,128)}', space=vmem, size = 0x12000, scoped, tag = 'internal scratch']
  #allocation2 [shape = 'f32[16,128]{1,0:T(8,128)}', space=vmem, size = 0x2000, scoped, tag = 'scratch operand']
  %s0 = inlined_call_operand.hbm [shape: f32[16,128], index: 0, kind: input, shape index: {}]
  %s1 = inlined_call_operand.hbm [shape: f32[1,128,512], index: 1, kind: input, shape index: {}]
  %s2 = inlined_call_operand.hbm [shape: f32[1,256,128], index: 2, kind: input, shape index: {}]
  %s3 = inlined_call_operand.hbm [shape: f32[16,128], index: 3, kind: output, shape index: {}]
  %s4 = sld [smem:[#allocation0]]
  $region46: #{feed_forward.1} parent=0
    _
  %s6 = ssub.s32 1, %s4
  %s7 = scalar_select 0, %s6, %s4
  $region1: #{feed_forward.1} parent=0
    #allocation3 [shape = 'u8[8192]{0}', space=vmem, size = 0x2000, scoped, tag = 'input window, operand 0, single buffered']
    #allocation4 [shape = 's32[1]{0}', space=sflag, size = 0x4, scoped, tag = 'scoped memory for feed_forward.1']
    #allocation5 [shape = 's32[1]{0}', space=sflag, size = 0x4, scoped, tag = 'scoped memory for feed_forward.1']
    #allocation6 [shape = 'u8[262144]{0}', space=vmem, size = 0x40000, scoped, tag = 'input window, operand 1, single buffered']
    #allocation7 [shape = 's32[1]{0}', space=sflag, size = 0x4, scoped, tag = 'scoped memory for feed_forward.1']
    #allocation8 [shape = 'u8[131072]{0}', space=vmem, size = 0x20000, scoped, tag = 'input window, operand 2, single buffered']
    #allocation9 [shape = 'u8[8192]{0}', space=vmem, size = 0x2000, scoped, tag = 'output window, operand 0, single buffered']
    %8 = vsyncpa [#allocation4], 0
    %9 = vsyncpa [#allocation7], 0
    %10 = vsyncpa [#allocation5], 0
    // Predicated region
    $region2: #{feed_forward.1} parent=1 // pred_check
      _
    $region3: #{feed_forward.1} parent=1 // pred_check_branch
      %12 = sbr.rel (0) target = $region5
    $region4: #{feed_forward.1} parent=1 // pred_region
      %s14 = ssub.s32 256, 256
      %15 = vsyncadd [#allocation4], %s14
      %s16 = sshll.u32 [#allocation3], 4
      %s17 = int_to_ptr.vmem [resolvable:$true] %s16
      %22 = dma.hbm_to_vmem [thread:$0]  %s0, 256, %s17, [#allocation4], 128, 128, 8
    $region5: #{feed_forward.1} parent=1 // pred_fallthru
      _
    // Predicated region
    $region6: #{feed_forward.1} parent=1 // pred_check
      _
    $region7: #{feed_forward.1} parent=1 // pred_check_branch
      %24 = sbr.rel (0) target = $region9
    $region8: #{feed_forward.1} parent=1 // pred_region
      %s26 = ssub.s32 8192, 8192
      %27 = vsyncadd [#allocation7], %s26
      %s28 = sshll.u32 [#allocation6], 4
      %s29 = int_to_ptr.vmem [resolvable:$true] %s28
      %34 = dma.hbm_to_vmem [thread:$0]  %s1, 8192, %s29, [#allocation7], 512, 512, 32
    $region9: #{feed_forward.1} parent=1 // pred_fallthru
      _
    // Predicated region
    $region10: #{feed_forward.1} parent=1 // pred_check
      _
    $region11: #{feed_forward.1} parent=1 // pred_check_branch
      %36 = sbr.rel (0) target = $region13
    $region12: #{feed_forward.1} parent=1 // pred_region
      %s38 = ssub.s32 4096, 4096
      %39 = vsyncadd [#allocation7], %s38
      %s40 = sshll.u32 [#allocation8], 4
      %s41 = int_to_ptr.vmem [resolvable:$true] %s40
      %46 = dma.hbm_to_vmem [thread:$0]  %s2, 4096, %s41, [#allocation7], 128, 128, 8
    $region13: #{feed_forward.1} parent=1 // pred_fallthru
      _
    // Predicated region
    $region14: #{feed_forward.1} parent=1 // pred_check
      _
    $region15: #{feed_forward.1} parent=1 // pred_check_branch
      %48 = sbr.rel (0) target = $region17
    $region16: #{feed_forward.1} parent=1 // pred_region
      %49 = dma.done [#allocation4], 256
    $region17: #{feed_forward.1} parent=1 // pred_fallthru
      _
    // Predicated region
    $region18: #{feed_forward.1} parent=1 // pred_check
      _
    $region19: #{feed_forward.1} parent=1 // pred_check_branch
      %51 = sbr.rel (0) target = $region21
    $region20: #{feed_forward.1} parent=1 // pred_region
      %52 = dma.done [#allocation7], 8192
    $region21: #{feed_forward.1} parent=1 // pred_fallthru
      _
    // Predicated region
    $region22: #{feed_forward.1} parent=1 // pred_check
      _
    $region23: #{feed_forward.1} parent=1 // pred_check_branch
      %54 = sbr.rel (0) target = $region25
    $region24: #{feed_forward.1} parent=1 // pred_region
      %55 = dma.done [#allocation7], 4096
    $region25: #{feed_forward.1} parent=1 // pred_fallthru
      _
    %v56 = vld [vmem:[#allocation3] sm:$0xff]
    %v57 = vld [vmem:[#allocation3 + $0x8] sm:$0xff]
    %v58 = vld [vmem:[#allocation6] sm:$0xff]
    %v59 = vld [vmem:[#allocation6 + $0x8] sm:$0xff]
    %v60 = vld [vmem:[#allocation6 + $0x10] sm:$0xff]
    %v61 = vld [vmem:[#allocation6 + $0x18] sm:$0xff]
    %v62 = vld [vmem:[#allocation6 + $0x20] sm:$0xff]
    %v63 = vld [vmem:[#allocation6 + $0x28] sm:$0xff]
    %v64 = vld [vmem:[#allocation6 + $0x30] sm:$0xff]
    %v65 = vld [vmem:[#allocation6 + $0x38] sm:$0xff]
    %v66 = vld [vmem:[#allocation6 + $0x40] sm:$0xff]
    %v67 = vld [vmem:[#allocation6 + $0x48] sm:$0xff]
    %v68 = vld [vmem:[#allocation6 + $0x50] sm:$0xff]
    %v69 = vld [vmem:[#allocation6 + $0x58] sm:$0xff]
    %v70 = vld [vmem:[#allocation6 + $0x60] sm:$0xff]
    %v71 = vld [vmem:[#allocation6 + $0x68] sm:$0xff]
    %v72 = vld [vmem:[#allocation6 + $0x70] sm:$0xff]
    %v73 = vld [vmem:[#allocation6 + $0x78] sm:$0xff]
    %v74 = vld [vmem:[#allocation6 + $0x80] sm:$0xff]
    %v75 = vld [vmem:[#allocation6 + $0x88] sm:$0xff]
    %v76 = vld [vmem:[#allocation6 + $0x90] sm:$0xff]
    %v77 = vld [vmem:[#allocation6 + $0x98] sm:$0xff]
    %v78 = vld [vmem:[#allocation6 + $0xa0] sm:$0xff]
    %v79 = vld [vmem:[#allocation6 + $0xa8] sm:$0xff]
    %v80 = vld [vmem:[#allocation6 + $0xb0] sm:$0xff]
    %v81 = vld [vmem:[#allocation6 + $0xb8] sm:$0xff]
    %v82 = vld [vmem:[#allocation6 + $0xc0] sm:$0xff]
    %v83 = vld [vmem:[#allocation6 + $0xc8] sm:$0xff]
    %v84 = vld [vmem:[#allocation6 + $0xd0] sm:$0xff]
    %v85 = vld [vmem:[#allocation6 + $0xd8] sm:$0xff]
    %v86 = vld [vmem:[#allocation6 + $0xe0] sm:$0xff]
    %v87 = vld [vmem:[#allocation6 + $0xe8] sm:$0xff]
    %v88 = vld [vmem:[#allocation6 + $0xf0] sm:$0xff]
    %v89 = vld [vmem:[#allocation6 + $0xf8] sm:$0xff]
    %v90 = vld [vmem:[#allocation6 + $0x100] sm:$0xff]
    %v91 = vld [vmem:[#allocation6 + $0x108] sm:$0xff]
    %v92 = vld [vmem:[#allocation6 + $0x110] sm:$0xff]
    %v93 = vld [vmem:[#allocation6 + $0x118] sm:$0xff]
    %v94 = vld [vmem:[#allocation6 + $0x120] sm:$0xff]
    %v95 = vld [vmem:[#allocation6 + $0x128] sm:$0xff]
    %v96 = vld [vmem:[#allocation6 + $0x130] sm:$0xff]
    %v97 = vld [vmem:[#allocation6 + $0x138] sm:$0xff]
    %v98 = vld [vmem:[#allocation6 + $0x140] sm:$0xff]
    %v99 = vld [vmem:[#allocation6 + $0x148] sm:$0xff]
    %v100 = vld [vmem:[#allocation6 + $0x150] sm:$0xff]
    %v101 = vld [vmem:[#allocation6 + $0x158] sm:$0xff]
    %v102 = vld [vmem:[#allocation6 + $0x160] sm:$0xff]
    %v103 = vld [vmem:[#allocation6 + $0x168] sm:$0xff]
    %v104 = vld [vmem:[#allocation6 + $0x170] sm:$0xff]
    %v105 = vld [vmem:[#allocation6 + $0x178] sm:$0xff]
    %v106 = vld [vmem:[#allocation6 + $0x180] sm:$0xff]
    %v107 = vld [vmem:[#allocation6 + $0x188] sm:$0xff]
    %v108 = vld [vmem:[#allocation6 + $0x190] sm:$0xff]
    %v109 = vld [vmem:[#allocation6 + $0x198] sm:$0xff]
    %v110 = vld [vmem:[#allocation6 + $0x1a0] sm:$0xff]
    %v111 = vld [vmem:[#allocation6 + $0x1a8] sm:$0xff]
    %v112 = vld [vmem:[#allocation6 + $0x1b0] sm:$0xff]
    %v113 = vld [vmem:[#allocation6 + $0x1b8] sm:$0xff]
    %v114 = vld [vmem:[#allocation6 + $0x1c0] sm:$0xff]
    %v115 = vld [vmem:[#allocation6 + $0x1c8] sm:$0xff]
    %v116 = vld [vmem:[#allocation6 + $0x1d0] sm:$0xff]
    %v117 = vld [vmem:[#allocation6 + $0x1d8] sm:$0xff]
    %v118 = vld [vmem:[#allocation6 + $0x1e0] sm:$0xff]
    %v119 = vld [vmem:[#allocation6 + $0x1e8] sm:$0xff]
    %v120 = vld [vmem:[#allocation6 + $0x1f0] sm:$0xff]
    %v121 = vld [vmem:[#allocation6 + $0x1f8] sm:$0xff]
    %122 = vmatprep.subr.mxu0 %v59
    %123 = vmatpush1.msra.mxu0 %v58
    %124 = vmatprep.subr.mxu0 %v63
    %125 = vmatpush1.msra.mxu0 %v62
    %126 = vmatprep.subr.mxu0 %v67
    %127 = vmatpush1.msra.mxu0 %v66
    %128 = vmatprep.subr.mxu0 %v71
    %129 = vmatpush1.msra.mxu0 %v70
    %130 = vmatprep.subr.mxu0 %v75
    %131 = vmatpush1.msra.mxu0 %v74
    %132 = vmatprep.subr.mxu0 %v79
    %133 = vmatpush1.msra.mxu0 %v78
    %134 = vmatprep.subr.mxu0 %v83
    %135 = vmatpush1.msra.mxu0 %v82
    %136 = vmatprep.subr.mxu0 %v87
    %137 = vmatpush1.msra.mxu0 %v86
    %138 = vmatprep.subr.mxu0 %v91
    %139 = vmatpush1.msra.mxu0 %v90
    %140 = vmatprep.subr.mxu0 %v95
    %141 = vmatpush1.msra.mxu0 %v94
    %142 = vmatprep.subr.mxu0 %v99
    %143 = vmatpush1.msra.mxu0 %v98
    %144 = vmatprep.subr.mxu0 %v103
    %145 = vmatpush1.msra.mxu0 %v102
    %146 = vmatprep.subr.mxu0 %v107
    %147 = vmatpush1.msra.mxu0 %v106
    %148 = vmatprep.subr.mxu0 %v111
    %149 = vmatpush1.msra.mxu0 %v110
    %150 = vmatprep.subr.mxu0 %v115
    %151 = vmatpush1.msra.mxu0 %v114
    %152 = vmatprep.subr.mxu0 %v119
    %153 = vmatpush1.msra.mxu0 %v118
    %154 = vmatprep.subr.mxu0 0.0
    %155 = vmatpush1.msra.mxu0 0.0
    %156 = vmatprep.subr.mxu0 0.0
    %157 = vmatpush1.msra.mxu0 0.0
    %158 = vmatprep.subr.mxu0 0.0
    %159 = vmatpush1.msra.mxu0 0.0
    %160 = vmatprep.subr.mxu0 0.0
    %161 = vmatpush1.msra.mxu0 0.0
    %162 = vmatprep.subr.mxu0 0.0
    %163 = vmatpush1.msra.mxu0 0.0
    %164 = vmatprep.subr.mxu0 0.0
    %165 = vmatpush1.msra.mxu0 0.0
    %166 = vmatprep.subr.mxu0 0.0
    %167 = vmatpush1.msra.mxu0 0.0
    %168 = vmatprep.subr.mxu0 0.0
    %169 = vmatpush1.msra.mxu0 0.0
    %170 = vmatprep.subr.mxu0 0.0
    %171 = vmatpush1.msra.mxu0 0.0
    %172 = vmatprep.subr.mxu0 0.0
    %173 = vmatpush1.msra.mxu0 0.0
    %174 = vmatprep.subr.mxu0 0.0
    %175 = vmatpush1.msra.mxu0 0.0
    %176 = vmatprep.subr.mxu0 0.0
    %177 = vmatpush1.msra.mxu0 0.0
    %178 = vmatprep.subr.mxu0 0.0
    %179 = vmatpush1.msra.mxu0 0.0
    %180 = vmatprep.subr.mxu0 0.0
    %181 = vmatpush1.msra.mxu0 0.0
    %182 = vmatprep.subr.mxu0 0.0
    %183 = vmatpush1.msra.mxu0 0.0
    %184 = vmatprep.subr.mxu0 0.0
    %185 = vmatpush1.msra.mxu0 0.0
    %186 = vmatprep.mubr.f32.mxu0 0.0
    %187 = vmatmul.mubr.f32.gmra.mrb[0].mxu0 %v56
    %v188 = vpop.f32.mrb[0].mxu0
    %v189 = vadd.f32 0.0, %v188
    %v190 = vpop.f32.mrb[0].mxu0
    %v191 = vadd.f32 0.0, %v190
    %192 = vmatprep.mubr.f32.mxu0 0.0
    %193 = vmatmul.mubr.f32.gmra.mrb[0].mxu0 %v57
    %v194 = vpop.f32.mrb[0].mxu0
    %v195 = vadd.f32 0.0, %v194
    %v196 = vpop.f32.mrb[0].mxu0
    %v197 = vadd.f32 0.0, %v196
    %198 = vdwg.mxu0
    %199 = vmatprep.subr.mxu0 %v61
    %200 = vmatpush1.msra.mxu0 %v60
    %201 = vmatprep.subr.mxu0 %v65
    %202 = vmatpush1.msra.mxu0 %v64
    %203 = vmatprep.subr.mxu0 %v69
    %204 = vmatpush1.msra.mxu0 %v68
    %205 = vmatprep.subr.mxu0 %v73
    %206 = vmatpush1.msra.mxu0 %v72
    %207 = vmatprep.subr.mxu0 %v77
    %208 = vmatpush1.msra.mxu0 %v76
    %209 = vmatprep.subr.mxu0 %v81
    %210 = vmatpush1.msra.mxu0 %v80
    %211 = vmatprep.subr.mxu0 %v85
    %212 = vmatpush1.msra.mxu0 %v84
    %213 = vmatprep.subr.mxu0 %v89
    %214 = vmatpush1.msra.mxu0 %v88
    %215 = vmatprep.subr.mxu0 %v93
    %216 = vmatpush1.msra.mxu0 %v92
    %217 = vmatprep.subr.mxu0 %v97
    %218 = vmatpush1.msra.mxu0 %v96
    %219 = vmatprep.subr.mxu0 %v101
    %220 = vmatpush1.msra.mxu0 %v100
    %221 = vmatprep.subr.mxu0 %v105
    %222 = vmatpush1.msra.mxu0 %v104
    %223 = vmatprep.subr.mxu0 %v109
    %224 = vmatpush1.msra.mxu0 %v108
    %225 = vmatprep.subr.mxu0 %v113
    %226 = vmatpush1.msra.mxu0 %v112
    %227 = vmatprep.subr.mxu0 %v117
    %228 = vmatpush1.msra.mxu0 %v116
    %229 = vmatprep.subr.mxu0 %v121
    %230 = vmatpush1.msra.mxu0 %v120
    %231 = vmatprep.subr.mxu0 0.0
    %232 = vmatpush1.msra.mxu0 0.0
    %233 = vmatprep.subr.mxu0 0.0
    %234 = vmatpush1.msra.mxu0 0.0
    %235 = vmatprep.subr.mxu0 0.0
    %236 = vmatpush1.msra.mxu0 0.0
    %237 = vmatprep.subr.mxu0 0.0
    %238 = vmatpush1.msra.mxu0 0.0
    %239 = vmatprep.subr.mxu0 0.0
    %240 = vmatpush1.msra.mxu0 0.0
    %241 = vmatprep.subr.mxu0 0.0
    %242 = vmatpush1.msra.mxu0 0.0
    %243 = vmatprep.subr.mxu0 0.0
    %244 = vmatpush1.msra.mxu0 0.0
    %245 = vmatprep.subr.mxu0 0.0
    %246 = vmatpush1.msra.mxu0 0.0
    %247 = vmatprep.subr.mxu0 0.0
    %248 = vmatpush1.msra.mxu0 0.0
    %249 = vmatprep.subr.mxu0 0.0
    %250 = vmatpush1.msra.mxu0 0.0
    %251 = vmatprep.subr.mxu0 0.0
    %252 = vmatpush1.msra.mxu0 0.0
    %253 = vmatprep.subr.mxu0 0.0
    %254 = vmatpush1.msra.mxu0 0.0
    %255 = vmatprep.subr.mxu0 0.0
    %256 = vmatpush1.msra.mxu0 0.0
    %257 = vmatprep.subr.mxu0 0.0
    %258 = vmatpush1.msra.mxu0 0.0
    %259 = vmatprep.subr.mxu0 0.0
    %260 = vmatpush1.msra.mxu0 0.0
    %261 = vmatprep.subr.mxu0 0.0
    %262 = vmatpush1.msra.mxu0 0.0
    %263 = vmatprep.mubr.f32.mxu0 0.0
    %264 = vmatmul.mubr.f32.gmra.mrb[0].mxu0 %v56
    %v265 = vpop.f32.mrb[0].mxu0
    %v266 = vadd.f32 0.0, %v265
    %v267 = vpop.f32.mrb[0].mxu0
    %v268 = vadd.f32 0.0, %v267
    %269 = vmatprep.mubr.f32.mxu0 0.0
    %270 = vmatmul.mubr.f32.gmra.mrb[0].mxu0 %v57
    %v271 = vpop.f32.mrb[0].mxu0
    %v272 = vadd.f32 0.0, %v271
    %v273 = vpop.f32.mrb[0].mxu0
    %v274 = vadd.f32 0.0, %v273
    %275 = vdwg.mxu0
    %v276 = vxor.u32 %v189, 2147483648
    %v277 = vxor.u32 %v191, 2147483648
    %v278 = vxor.u32 %v195, 2147483648
    %v279 = vxor.u32 %v197, 2147483648
    %v280 = vmul.f32 %v276, 1.442695
    %v281 = vpow.pop %v280
    %v282 = vmul.f32 %v277, 1.442695
    %v283 = vpow.pop %v282
    %v284 = vmul.f32 %v278, 1.442695
    %v285 = vpow.pop %v284
    %v286 = vmul.f32 %v279, 1.442695
    %v287 = vpow.pop %v286
    %v288 = vadd.f32 %v281, 1.0
    %v289 = vadd.f32 %v283, 1.0
    %v290 = vadd.f32 %v285, 1.0
    %v291 = vadd.f32 %v287, 1.0
    %v292 = vrcp.pop %v288
    %v293 = vmul.f32 1.0, %v292
    %v294 = vrcp.pop %v289
    %v295 = vmul.f32 1.0, %v294
    %v296 = vrcp.pop %v290
    %v297 = vmul.f32 1.0, %v296
    %v298 = vrcp.pop %v291
    %v299 = vmul.f32 1.0, %v298
    %v300 = vmul.f32 %v189, %v293
    %v301 = vmul.f32 %v191, %v295
    %v302 = vmul.f32 %v195, %v297
    %v303 = vmul.f32 %v197, %v299
    %v304 = vmul.f32 %v300, %v266
    %v305 = vmul.f32 %v301, %v268
    %v306 = vmul.f32 %v302, %v272
    %v307 = vmul.f32 %v303, %v274
    %v308 = vld [vmem:[#allocation8] sm:$0xff]
    %v309 = vld [vmem:[#allocation8 + $0x8] sm:$0xff]
    %v310 = vld [vmem:[#allocation8 + $0x10] sm:$0xff]
    %v311 = vld [vmem:[#allocation8 + $0x18] sm:$0xff]
    %v312 = vld [vmem:[#allocation8 + $0x20] sm:$0xff]
    %v313 = vld [vmem:[#allocation8 + $0x28] sm:$0xff]
    %v314 = vld [vmem:[#allocation8 + $0x30] sm:$0xff]
    %v315 = vld [vmem:[#allocation8 + $0x38] sm:$0xff]
    %v316 = vld [vmem:[#allocation8 + $0x40] sm:$0xff]
    %v317 = vld [vmem:[#allocation8 + $0x48] sm:$0xff]
    %v318 = vld [vmem:[#allocation8 + $0x50] sm:$0xff]
    %v319 = vld [vmem:[#allocation8 + $0x58] sm:$0xff]
    %v320 = vld [vmem:[#allocation8 + $0x60] sm:$0xff]
    %v321 = vld [vmem:[#allocation8 + $0x68] sm:$0xff]
    %v322 = vld [vmem:[#allocation8 + $0x70] sm:$0xff]
    %v323 = vld [vmem:[#allocation8 + $0x78] sm:$0xff]
    %v324 = vld [vmem:[#allocation8 + $0x80] sm:$0xff]
    %v325 = vld [vmem:[#allocation8 + $0x88] sm:$0xff]
    %v326 = vld [vmem:[#allocation8 + $0x90] sm:$0xff]
    %v327 = vld [vmem:[#allocation8 + $0x98] sm:$0xff]
    %v328 = vld [vmem:[#allocation8 + $0xa0] sm:$0xff]
    %v329 = vld [vmem:[#allocation8 + $0xa8] sm:$0xff]
    %v330 = vld [vmem:[#allocation8 + $0xb0] sm:$0xff]
    %v331 = vld [vmem:[#allocation8 + $0xb8] sm:$0xff]
    %v332 = vld [vmem:[#allocation8 + $0xc0] sm:$0xff]
    %v333 = vld [vmem:[#allocation8 + $0xc8] sm:$0xff]
    %v334 = vld [vmem:[#allocation8 + $0xd0] sm:$0xff]
    %v335 = vld [vmem:[#allocation8 + $0xd8] sm:$0xff]
    %v336 = vld [vmem:[#allocation8 + $0xe0] sm:$0xff]
    %v337 = vld [vmem:[#allocation8 + $0xe8] sm:$0xff]
    %v338 = vld [vmem:[#allocation8 + $0xf0] sm:$0xff]
    %v339 = vld [vmem:[#allocation8 + $0xf8] sm:$0xff]
    %340 = vmatprep.subr.mxu0 0.0
    %341 = vmatpush1.msra.mxu0 %v308
    %342 = vmatprep.subr.mxu0 0.0
    %343 = vmatpush1.msra.mxu0 %v309
    %344 = vmatprep.subr.mxu0 0.0
    %345 = vmatpush1.msra.mxu0 %v310
    %346 = vmatprep.subr.mxu0 0.0
    %347 = vmatpush1.msra.mxu0 %v311
    %348 = vmatprep.subr.mxu0 0.0
    %349 = vmatpush1.msra.mxu0 %v312
    %350 = vmatprep.subr.mxu0 0.0
    %351 = vmatpush1.msra.mxu0 %v313
    %352 = vmatprep.subr.mxu0 0.0
    %353 = vmatpush1.msra.mxu0 %v314
    %354 = vmatprep.subr.mxu0 0.0
    %355 = vmatpush1.msra.mxu0 %v315
    %356 = vmatprep.subr.mxu0 0.0
    %357 = vmatpush1.msra.mxu0 %v316
    %358 = vmatprep.subr.mxu0 0.0
    %359 = vmatpush1.msra.mxu0 %v317
    %360 = vmatprep.subr.mxu0 0.0
    %361 = vmatpush1.msra.mxu0 %v318
    %362 = vmatprep.subr.mxu0 0.0
    %363 = vmatpush1.msra.mxu0 %v319
    %364 = vmatprep.subr.mxu0 0.0
    %365 = vmatpush1.msra.mxu0 %v320
    %366 = vmatprep.subr.mxu0 0.0
    %367 = vmatpush1.msra.mxu0 %v321
    %368 = vmatprep.subr.mxu0 0.0
    %369 = vmatpush1.msra.mxu0 %v322
    %370 = vmatprep.subr.mxu0 0.0
    %371 = vmatpush1.msra.mxu0 %v323
    %372 = vmatprep.subr.mxu0 0.0
    %373 = vmatpush1.msra.mxu0 %v324
    %374 = vmatprep.subr.mxu0 0.0
    %375 = vmatpush1.msra.mxu0 %v325
    %376 = vmatprep.subr.mxu0 0.0
    %377 = vmatpush1.msra.mxu0 %v326
    %378 = vmatprep.subr.mxu0 0.0
    %379 = vmatpush1.msra.mxu0 %v327
    %380 = vmatprep.subr.mxu0 0.0
    %381 = vmatpush1.msra.mxu0 %v328
    %382 = vmatprep.subr.mxu0 0.0
    %383 = vmatpush1.msra.mxu0 %v329
    %384 = vmatprep.subr.mxu0 0.0
    %385 = vmatpush1.msra.mxu0 %v330
    %386 = vmatprep.subr.mxu0 0.0
    %387 = vmatpush1.msra.mxu0 %v331
    %388 = vmatprep.subr.mxu0 0.0
    %389 = vmatpush1.msra.mxu0 %v332
    %390 = vmatprep.subr.mxu0 0.0
    %391 = vmatpush1.msra.mxu0 %v333
    %392 = vmatprep.subr.mxu0 0.0
    %393 = vmatpush1.msra.mxu0 %v334
    %394 = vmatprep.subr.mxu0 0.0
    %395 = vmatpush1.msra.mxu0 %v335
    %396 = vmatprep.subr.mxu0 0.0
    %397 = vmatpush1.msra.mxu0 %v336
    %398 = vmatprep.subr.mxu0 0.0
    %399 = vmatpush1.msra.mxu0 %v337
    %400 = vmatprep.subr.mxu0 0.0
    %401 = vmatpush1.msra.mxu0 %v338
    %402 = vmatprep.subr.mxu0 0.0
    %403 = vmatpush1.msra.mxu0 %v339
    %404 = vmatprep.mubr.f32.mxu0 %v305
    %405 = vmatmul.mubr.f32.gmra.mrb[0].mxu0 %v304
    %v406 = vpop.f32.mrb[0].mxu0
    %v407 = vadd.f32 0.0, %v406
    %v408 = vpop.f32.mrb[0].mxu0
    %409 = vmatprep.mubr.f32.mxu0 %v307
    %410 = vmatmul.mubr.f32.gmra.mrb[0].mxu0 %v306
    %v411 = vpop.f32.mrb[0].mxu0
    %v412 = vadd.f32 0.0, %v411
    %v413 = vpop.f32.mrb[0].mxu0
    %414 = vdwg.mxu0
    %p415 = scmp.eq.s32.totalorder 0, 0
    // Predicated region
    $region26: #{feed_forward.1} parent=1 // pred_check
      %p416 = pneg %p415
    $region27: #{feed_forward.1} parent=1 // pred_check_branch
      %418 = sbr.rel (%p416) target = $region29
    $region28: #{feed_forward.1} parent=1 // pred_region
      %419 = vst [vmem:[#allocation2] sm:$0xff] %v407
      %420 = vst [vmem:[#allocation2 + $0x8] sm:$0xff] %v412
    $region29: #{feed_forward.1} parent=1 // pred_fallthru
      _
    %p421 = scmp.gt.s32.totalorder 0, 0
    // Predicated region
    $region30: #{feed_forward.1} parent=1 // pred_check
      %p422 = pneg %p421
    $region31: #{feed_forward.1} parent=1 // pred_check_branch
      %424 = sbr.rel (%p422) target = $region33
    $region32: #{feed_forward.1} parent=1 // pred_region
      %v425 = vld [vmem:[#allocation2] sm:$0xff]
      %v426 = vld [vmem:[#allocation2 + $0x8] sm:$0xff]
      %v427 = vadd.f32 %v425, %v407
      %v428 = vadd.f32 %v426, %v412
      %429 = vst [vmem:[#allocation2] sm:$0xff] %v427
      %430 = vst [vmem:[#allocation2 + $0x8] sm:$0xff] %v428
    $region33: #{feed_forward.1} parent=1 // pred_fallthru
      _
    // Predicated region
    $region34: #{feed_forward.1} parent=1 // pred_check
      %p431 = pneg %p415
    $region35: #{feed_forward.1} parent=1 // pred_check_branch
      %433 = sbr.rel (%p431) target = $region37
    $region36: #{feed_forward.1} parent=1 // pred_region
      %v434 = vld [vmem:[#allocation2] sm:$0xff]
      %v435 = vld [vmem:[#allocation2 + $0x8] sm:$0xff]
      %436 = vst [vmem:[#allocation9] sm:$0xff] %v434
      %437 = vst [vmem:[#allocation9 + $0x8] sm:$0xff] %v435
    $region37: #{feed_forward.1} parent=1 // pred_fallthru
      _
    // Predicated region
    $region38: #{feed_forward.1} parent=1 // pred_check
      _
    $region39: #{feed_forward.1} parent=1 // pred_check_branch
      %439 = sbr.rel (0) target = $region41
    $region40: #{feed_forward.1} parent=1 // pred_region
      %s441 = ssub.s32 256, 256
      %442 = vsyncadd [#allocation5], %s441
      %s443 = sshll.u32 [#allocation9], 4
      %s444 = int_to_ptr.vmem [resolvable:$true] %s443
      %449 = dma.vmem_to_hbm [thread:$0]  %s444, 256, %s3, [#allocation5], 128, 128, 8
    $region41: #{feed_forward.1} parent=1 // pred_fallthru
      _
    // Predicated region
    $region42: #{feed_forward.1} parent=1 // pred_check
      _
    $region43: #{feed_forward.1} parent=1 // pred_check_branch
      %451 = sbr.rel (0) target = $region45
    $region44: #{feed_forward.1} parent=1 // pred_region
      %452 = dma.done [#allocation5], 256
    $region45: #{feed_forward.1} parent=1 // pred_fallthru
      _
    %453 = vsyncpa [#allocation4], 1
    %454 = vsyncpa [#allocation7], 1
    %455 = vsyncpa [#allocation5], 1

</llo_original>
